<compile_context>
chip_gen: v7x
topology: tpu7x:2x2x1
jax: 0.10.0
libtpu: 0.0.40
codegen_flags: <defaults>
</compile_context>

<pallas_src>
import functools
import math

import jax
import jax.numpy as jnp
import numpy as np
from jax import lax
from jax.experimental import pallas as pl
from jax.experimental.pallas import tpu as pltpu

LANES = 128                          # vreg lane width
ROW_CAP = 2048                       # max slab width (elements)
TARGET_BLOCK_BYTES = 2 * 1024 * 1024  # ~2 MiB per block (native dtype)


def _sublane_multiple(itemsize):
    if itemsize >= 4:
        return 8
    if itemsize == 2:
        return 16
    return 32


def _exact_gelu(v):
    # PyTorch nn.GELU() default (approximate='none'): x * (0.5 + 0.5*erf(x/sqrt2))
    inv_sqrt2 = jnp.asarray(0.7071067811865476, dtype=v.dtype)
    return v * (0.5 + 0.5 * lax.erf(v * inv_sqrt2))


def _split_kernel(x_ref, o_ref, *, half):
    # Fast path: `half` is a multiple of 128 -> tile-aligned column slices,
    # each element evaluates exactly one branch.
    x = x_ref[...].astype(jnp.float32)
    o_ref[:, :half] = jnp.sin(x[:, :half]).astype(o_ref.dtype)
    o_ref[:, half:] = _exact_gelu(x[:, half:]).astype(o_ref.dtype)


def _masked_kernel(mask_ref, x_ref, o_ref):
    # General path: (1, C) column mask broadcast over rows; the compare is on
    # a single row (negligible), the vsel is per-element.
    x = x_ref[...].astype(jnp.float32)
    use_sin = mask_ref[...] != 0.0
    o_ref[...] = jnp.where(use_sin, jnp.sin(x), _exact_gelu(x)).astype(o_ref.dtype)


def _choose_row_width(n, W):
    """Widest multiple of lcm(W, 128) (<= ROW_CAP) that divides n exactly."""
    base = (W * LANES) // math.gcd(W, LANES)
    if base > ROW_CAP:
        return base if n % base == 0 else None
    for k in range(ROW_CAP // base, 0, -1):
        r = base * k
        if n % r == 0:
            return r
    return None


def _choose_block_rows(rows, row_width, itemsize):
    sub = _sublane_multiple(itemsize)
    target = max(sub, (TARGET_BLOCK_BYTES // max(1, row_width * itemsize)) // sub * sub)
    if rows <= 2 * sub:
        return rows                                   # tiny: one full block
    half_rows = max(sub, (rows // 2) // sub * sub)    # ensure >= 2 grid steps
    return max(sub, min(target, half_rows))


def _run(kernel, slab, extra_inputs, extra_specs, block_rows, row_width, out_dtype):
    rows = slab.shape[0]
    grid = (pl.cdiv(rows, block_rows),)
    return pl.pallas_call(
        kernel,
        out_shape=jax.ShapeDtypeStruct((rows, row_width), out_dtype),
        grid_spec=pltpu.PrefetchScalarGridSpec(
            num_scalar_prefetch=0,
            grid=grid,
            in_specs=list(extra_specs) + [
                pl.BlockSpec((block_rows, row_width), lambda i: (i, 0)),
            ],
            out_specs=pl.BlockSpec((block_rows, row_width), lambda i: (i, 0)),
        ),
        compiler_params=pltpu.CompilerParams(
            dimension_semantics=("parallel",),
            vmem_limit_bytes=32 * 1024 * 1024,
        ),
    )(*extra_inputs, slab)


def _singelu(x):
    """sin(x[..., :W//2]) ++ GELU(x[..., W//2:]) along the last dim."""
    shape = x.shape
    dtype = x.dtype
    W = shape[-1]
    half = W // 2
    n = int(np.prod(shape))
    itemsize = jnp.dtype(dtype).itemsize

    if W % (2 * LANES) == 0:
        # Lane-aligned fast path: one branch per element, no mask input.
        rows = n // W
        slab = x.reshape(rows, W)
        block_rows = _choose_block_rows(rows, W, itemsize)
        out = _run(functools.partial(_split_kernel, half=half),
                   slab, (), (), block_rows, W, dtype)
    else:
        # Masked path: lane-dense slab whose width is a multiple of 128 and of
        # W, so the sin/GELU decision depends only on the column index.
        row = _choose_row_width(n, W)
        if row is None:
            row = W            # full-width block is always a legal block shape
        rows = n // row
        slab = x.reshape(rows, row)
        mask = jnp.asarray(
            (np.arange(row) % W < half).astype(np.float32).reshape(1, row))
        mask_spec = pl.BlockSpec((1, row), lambda i: (0, 0))
        block_rows = _choose_block_rows(rows, row, itemsize)
        out = _run(_masked_kernel, slab, (mask,), (mask_spec,),
                   block_rows, row, dtype)

    return out.reshape(shape)


singelu = jax.jit(_singelu)


def singelu_ref(x):
    W = x.shape[-1]
    return jnp.concatenate(
        [jnp.sin(x[..., : W // 2]),
         jax.nn.gelu(x[..., W // 2:], approximate=False)],
        axis=-1,
    )


if __name__ == "__main__":
    key = jax.random.PRNGKey(0)

    # Shape from the module spec (masked path: W=16 is not lane-aligned).
    B, C, H, W = 2, 4, 16, 16
    x = jax.random.normal(key, (B, C, H, W), dtype=jnp.float32)
    out = jax.block_until_ready(singelu(x))
    assert out.shape == x.shape and out.dtype == x.dtype
    ref = singelu_ref(x)
    assert bool(jnp.allclose(out, ref, atol=1e-5, rtol=1e-5)), (
        "masked path: max abs err = %e" % float(jnp.max(jnp.abs(out - ref)))
    )

    # Small lane-aligned case to exercise the single-branch fast path.
    key2 = jax.random.PRNGKey(0)
    x2 = jax.random.normal(key2, (2, 4, 256), dtype=jnp.float32)
    out2 = jax.block_until_ready(singelu(x2))
    ref2 = singelu_ref(x2)
    assert bool(jnp.allclose(out2, ref2, atol=1e-5, rtol=1e-5)), (
        "aligned path: max abs err = %e" % float(jnp.max(jnp.abs(out2 - ref2)))
    )

    print("KERNEL_OK")
</pallas_src>

<mosaic_0001>
module attributes {stable_mosaic.version = 11 : i64} {
  func.func @_masked_kernel(%arg0: i32, %arg1: memref<1x2048xf32, #tpu.memory_space<vmem>>, %arg2: memref<1x2048xf32, #tpu.memory_space<vmem>>, %arg3: memref<1x2048xf32, #tpu.memory_space<vmem>>) attributes {dimension_semantics = [#tpu.dimension_semantics<parallel>], iteration_bounds = array<i64: 1>, scalar_prefetch = 0 : i64, scratch_operands = 0 : i64, tpu.core_type = #tpu.core_type<tc>, window_params = [{pipeline_mode = #tpu.pipeline_mode<synchronous>, transform_indices = @transform_0, window_bounds = array<i64: 1, 2048>}, {transform_indices = @transform_1, window_bounds = array<i64: 1, 2048>}, {transform_indices = @transform_2, window_bounds = array<i64: 1, 2048>}]} {
    %c0 = arith.constant 0 : index
    %c0_0 = arith.constant 0 : index
    %0 = vector.load %arg2[%c0, %c0_0] : memref<1x2048xf32, #tpu.memory_space<vmem>>, vector<1x2048xf32>
    %c0_1 = arith.constant 0 : index
    %c0_2 = arith.constant 0 : index
    %1 = vector.load %arg1[%c0_1, %c0_2] : memref<1x2048xf32, #tpu.memory_space<vmem>>, vector<1x2048xf32>
    %cst = arith.constant 0.000000e+00 : f32
    %2 = vector.broadcast %cst : f32 to vector<1x2048xf32>
    %3 = arith.cmpf one, %1, %2 : vector<1x2048xf32>
    %4 = math.sin %0 : vector<1x2048xf32>
    %cst_3 = arith.constant 0.707106769 : f32
    %5 = vector.broadcast %cst_3 : f32 to vector<1x2048xf32>
    %6 = arith.mulf %0, %5 : vector<1x2048xf32>
    %7 = math.erf %6 : vector<1x2048xf32>
    %cst_4 = arith.constant 5.000000e-01 : f32
    %8 = vector.broadcast %cst_4 : f32 to vector<1x2048xf32>
    %9 = arith.mulf %8, %7 : vector<1x2048xf32>
    %cst_5 = arith.constant 5.000000e-01 : f32
    %10 = vector.broadcast %cst_5 : f32 to vector<1x2048xf32>
    %11 = arith.addf %10, %9 : vector<1x2048xf32>
    %12 = arith.mulf %0, %11 : vector<1x2048xf32>
    %13 = arith.select %3, %4, %12 : vector<1x2048xi1>, vector<1x2048xf32>
    %c0_6 = arith.constant 0 : index
    %c0_7 = arith.constant 0 : index
    %14 = vector.load %arg3[%c0_6, %c0_7] : memref<1x2048xf32, #tpu.memory_space<vmem>>, vector<1x2048xf32>
    tpu.vector_store %arg3[%c0_6, %c0_7], %13 {strides = array<i32>} : memref<1x2048xf32, #tpu.memory_space<vmem>>, vector<1x2048xf32>,
    return
  }
  func.func @transform_0(%arg0: i32) -> (i32, i32) {
    %c0_i32 = arith.constant 0 : i32
    %c0_i32_0 = arith.constant 0 : i32
    %c0_i32_1 = arith.constant 0 : i32
    return %c0_i32, %c0_i32_0 : i32, i32
  }
  func.func @transform_1(%arg0: i32) -> (i32, i32) {
    %c0_i32 = arith.constant 0 : i32
    %c0_i32_0 = arith.constant 0 : i32
    return %arg0, %c0_i32 : i32, i32
  }
  func.func @transform_2(%arg0: i32) -> (i32, i32) {
    %c0_i32 = arith.constant 0 : i32
    %c0_i32_0 = arith.constant 0 : i32
    return %arg0, %c0_i32 : i32, i32
  }
}

</mosaic_0001>

<llo_original>
// kernel: _singelu.1
$region0: #{_singelu.1}
  #allocation0 [shape = 'u32[]', space=smem, size = 0x4, offset = 0x4, fixed_abs, tag = 'smem constant byte address 0x4 - core index']
  #allocation1 [shape = 'u32[144,128]{1,0:T(1,128)}', space=vmem, size = 0x12000, scoped, tag = 'internal scratch']
  %s0 = inlined_call_operand.vmem [shape: f32[1,2048], index: 0, kind: input, shape index: {}]
  %s1 = inlined_call_operand.vmem [shape: f32[1,2048], index: 1, kind: input, shape index: {}]
  %s2 = inlined_call_operand.vmem [shape: f32[1,2048], index: 2, kind: output, shape index: {}]
  %s3 = sld [smem:[#allocation0]]
  $region18: #{_singelu.1} parent=0
    _
  %s5 = ssub.s32 1, %s3
  %s6 = scalar_select 0, %s5, %s3
  // Predicated region
  $region2: #{_singelu.1} parent=0 // pred_check
    _
  $region3: #{_singelu.1} parent=0 // pred_check_branch
    %8 = sbr.rel (0) target = $region5
  $region4: #{_singelu.1} parent=0 // pred_region
    _
  $region5: #{_singelu.1} parent=0 // pred_fallthru
    _
  // Predicated region
  $region6: #{_singelu.1} parent=0 // pred_check
    _
  $region7: #{_singelu.1} parent=0 // pred_check_branch
    %10 = sbr.rel (0) target = $region9
  $region8: #{_singelu.1} parent=0 // pred_region
    _
  $region9: #{_singelu.1} parent=0 // pred_fallthru
    _
  %v11 = vld [vmem:[%s1] sm:$0xff]
  %v12 = vld [vmem:[%s1 + $0x8] sm:$0xff]
  %v13 = vld [vmem:[%s0] sm:$0xff]
  %v14 = vld [vmem:[%s0 + $0x8] sm:$0xff]
  %vm15 = vcmp.ne.f32.partialorder %v13, 0.0
  %vm16 = vcmp.ne.f32.partialorder %v14, 0.0
  %v17 = vand.u32 2147483647, %v11
  %vm18 = vcmp.le.f32.partialorder %v17, 0.7853982
  %vm19 = vcmp.lt.s32.totalorder %v11, 0
  %v20 = vand.u32 %v11, 2139095040
  %v21 = vshrl.u32 %v20, 23
  %v22 = vsub.s32 %v21, 127
  %v23 = vand.u32 2147483647, %v11
  %v24 = vand.u32 %v23, 8388607
  %v25 = vor.u32 %v24, 8388608
  %v26 = vsub.s32 0, %v25
  %v27 = vadd.s32 %v22, 1
  %vm28 = vcmp.gt.s32.totalorder %v27, 0
  %v29 = vsel %vm28, %v27, 0
  %v30 = vshrl.u32 %v29, 5
  %v31 = vand.u32 %v29, 31
  %v32 = vsub.s32 32, %v31
  %v33 = vshrl.u32 683565275, %v32
  %v34 = vshll.u32 683565275, %v31
  %v35 = vshrl.u32 2475754826, %v32
  %v36 = vor.u32 %v34, %v35
  %v37 = vshll.u32 2475754826, %v31
  %v38 = vshrl.u32 2131351028, %v32
  %v39 = vor.u32 %v37, %v38
  %v40 = vshll.u32 2131351028, %v31
  %v41 = vshrl.u32 2102212464, %v32
  %v42 = vor.u32 %v40, %v41
  %v43 = vshll.u32 2102212464, %v31
  %v44 = vshrl.u32 920167782, %v32
  %v45 = vor.u32 %v43, %v44
  %v46 = vshll.u32 920167782, %v31
  %v47 = vshrl.u32 1326507024, %v32
  %v48 = vor.u32 %v46, %v47
  %vm49 = vcmp.lt.s32.totalorder %v30, 1
  %vm50 = vcmp.lt.s32.totalorder %v30, 2
  %vm51 = vcmp.lt.s32.totalorder %v30, 3
  %vm52 = vcmp.lt.s32.totalorder %v30, 4
  %v53 = vsel %vm49, %v33, %v36
  %v54 = vsel %vm52, %v42, 2102212464
  %v55 = vsel %vm51, %v39, %v54
  %v56 = vsel %vm50, %v53, %v55
  %v57 = vsel %vm49, %v36, %v39
  %v58 = vsel %vm52, %v45, 920167782
  %v59 = vsel %vm51, %v42, %v58
  %v60 = vsel %vm50, %v57, %v59
  %v61 = vsel %vm49, %v39, %v42
  %v62 = vsel %vm52, %v48, 1326507024
  %v63 = vsel %vm51, %v45, %v62
  %v64 = vsel %vm50, %v61, %v63
  %v65 = vshll.u32 %v25, 8
  %v66 = vmul.u32.u64.compose %v65, %v64
  %v67 = vextract.low.u32 %v66
  %v68 = vextract.high.u32 %v66
  %v69 = vmul.u32.u64.compose %v65, %v60
  %v70 = vextract.low.u32 %v69
  %v71 = vextract.high.u32 %v69
  %v72 = vmul.u32 %v65, %v56
  %v73 = vadd.s32 %v68, %v70
  %vm74 = vc.u32 %v68, %v70
  %v75 = vadd.s32 %v71, 1
  %v76 = vsel %vm74, %v75, %v71
  %v77 = vadd.s32 %v72, %v76
  %v78 = vadd.s32 %v77, 536870912
  %v79 = vshrl.u32 %v78, 30
  %v80 = vshll.u32 %v79, 30
  %v81 = vsub.s32 %v77, %v80
  %vm82 = vcmp.lt.s32.totalorder %v81, 0
  %v83 = vsub.s32 0, %v81
  %v84 = vsel %vm82, %v83, %v81
  %v85 = vclz %v84
  %v86 = vsub.s32 %v85, 2
  %vm87 = vcmp.gt.s32.totalorder 0, %v86
  %v88 = vsel %vm87, 0, %v86
  %v89 = vsub.s32 32, %v88
  %v90 = vshll.u32 %v81, %v88
  %v91 = vshrl.u32 %v73, %v89
  %v92 = vor.u32 %v90, %v91
  %v93 = vsub.s32 4294967266, %v88
  %v94 = vadd.s32 %v93, 127
  %v95 = vshll.u32 %v94, 23
  %v96 = vor.u32 4788187, %v95
  %v97 = vand.u32 2147483647, %v96
  %v99 = vcvt.s32.f32 %v92
  %v100 = vmul.f32 %v99, %v97
  %v101 = vxor.u32 %v100, 2147483648
  %v102 = vsel %vm19, %v101, %v100
  %v103 = vsub.s32 4, %v79
  %v104 = vsel %vm19, %v103, %v79
  %v105 = vsel %vm18, %v11, %v102
  %v106 = vsel %vm18, 0, %v104
  %v107 = vcosq.f32.pop %v105
  %v108 = vsinq.f32.pop %v105
  %vm109 = vweird.f32 %v11
  %v110 = vadd.s32 %v106, 3
  %v111 = vand.u32 %v110, 3
  %vm112 = vcmp.lt.s32.totalorder %v111, 2
  %vm113 = vcmp.eq.s32.totalorder %v111, 0
  %v114 = vxor.u32 %v108, 2147483648
  %v115 = vsel %vm113, %v107, %v114
  %vm116 = vcmp.eq.s32.totalorder %v111, 2
  %v117 = vxor.u32 %v107, 2147483648
  %v118 = vsel %vm116, %v117, %v108
  %v119 = vsel %vm112, %v115, %v118
  %v120 = vsel %vm109, nan, %v119
  %v121 = vand.u32 2147483647, %v12
  %vm122 = vcmp.le.f32.partialorder %v121, 0.7853982
  %vm123 = vcmp.lt.s32.totalorder %v12, 0
  %v124 = vand.u32 %v12, 2139095040
  %v125 = vshrl.u32 %v124, 23
  %v126 = vsub.s32 %v125, 127
  %v127 = vand.u32 2147483647, %v12
  %v128 = vand.u32 %v127, 8388607
  %v129 = vor.u32 %v128, 8388608
  %v130 = vsub.s32 0, %v129
  %v131 = vadd.s32 %v126, 1
  %vm132 = vcmp.gt.s32.totalorder %v131, 0
  %v133 = vsel %vm132, %v131, 0
  %v134 = vshrl.u32 %v133, 5
  %v135 = vand.u32 %v133, 31
  %v136 = vsub.s32 32, %v135
  %v137 = vshrl.u32 683565275, %v136
  %v138 = vshll.u32 683565275, %v135
  %v139 = vshrl.u32 2475754826, %v136
  %v140 = vor.u32 %v138, %v139
  %v141 = vshll.u32 2475754826, %v135
  %v142 = vshrl.u32 2131351028, %v136
  %v143 = vor.u32 %v141, %v142
  %v144 = vshll.u32 2131351028, %v135
  %v145 = vshrl.u32 2102212464, %v136
  %v146 = vor.u32 %v144, %v145
  %v147 = vshll.u32 2102212464, %v135
  %v148 = vshrl.u32 920167782, %v136
  %v149 = vor.u32 %v147, %v148
  %v150 = vshll.u32 920167782, %v135
  %v151 = vshrl.u32 1326507024, %v136
  %v152 = vor.u32 %v150, %v151
  %vm153 = vcmp.lt.s32.totalorder %v134, 1
  %vm154 = vcmp.lt.s32.totalorder %v134, 2
  %vm155 = vcmp.lt.s32.totalorder %v134, 3
  %vm156 = vcmp.lt.s32.totalorder %v134, 4
  %v157 = vsel %vm153, %v137, %v140
  %v158 = vsel %vm156, %v146, 2102212464
  %v159 = vsel %vm155, %v143, %v158
  %v160 = vsel %vm154, %v157, %v159
  %v161 = vsel %vm153, %v140, %v143
  %v162 = vsel %vm156, %v149, 920167782
  %v163 = vsel %vm155, %v146, %v162
  %v164 = vsel %vm154, %v161, %v163
  %v165 = vsel %vm153, %v143, %v146
  %v166 = vsel %vm156, %v152, 1326507024
  %v167 = vsel %vm155, %v149, %v166
  %v168 = vsel %vm154, %v165, %v167
  %v169 = vshll.u32 %v129, 8
  %v170 = vmul.u32.u64.compose %v169, %v168
  %v171 = vextract.low.u32 %v170
  %v172 = vextract.high.u32 %v170
  %v173 = vmul.u32.u64.compose %v169, %v164
  %v174 = vextract.low.u32 %v173
  %v175 = vextract.high.u32 %v173
  %v176 = vmul.u32 %v169, %v160
  %v177 = vadd.s32 %v172, %v174
  %vm178 = vc.u32 %v172, %v174
  %v179 = vadd.s32 %v175, 1
  %v180 = vsel %vm178, %v179, %v175
  %v181 = vadd.s32 %v176, %v180
  %v182 = vadd.s32 %v181, 536870912
  %v183 = vshrl.u32 %v182, 30
  %v184 = vshll.u32 %v183, 30
  %v185 = vsub.s32 %v181, %v184
  %vm186 = vcmp.lt.s32.totalorder %v185, 0
  %v187 = vsub.s32 0, %v185
  %v188 = vsel %vm186, %v187, %v185
  %v189 = vclz %v188
  %v190 = vsub.s32 %v189, 2
  %vm191 = vcmp.gt.s32.totalorder 0, %v190
  %v192 = vsel %vm191, 0, %v190
  %v193 = vsub.s32 32, %v192
  %v194 = vshll.u32 %v185, %v192
  %v195 = vshrl.u32 %v177, %v193
  %v196 = vor.u32 %v194, %v195
  %v197 = vsub.s32 4294967266, %v192
  %v198 = vadd.s32 %v197, 127
  %v199 = vshll.u32 %v198, 23
  %v200 = vor.u32 4788187, %v199
  %v201 = vand.u32 2147483647, %v200
  %v203 = vcvt.s32.f32 %v196
  %v204 = vmul.f32 %v203, %v201
  %v205 = vxor.u32 %v204, 2147483648
  %v206 = vsel %vm123, %v205, %v204
  %v207 = vsub.s32 4, %v183
  %v208 = vsel %vm123, %v207, %v183
  %v209 = vsel %vm122, %v12, %v206
  %v210 = vsel %vm122, 0, %v208
  %v211 = vcosq.f32.pop %v209
  %v212 = vsinq.f32.pop %v209
  %vm213 = vweird.f32 %v12
  %v214 = vadd.s32 %v210, 3
  %v215 = vand.u32 %v214, 3
  %vm216 = vcmp.lt.s32.totalorder %v215, 2
  %vm217 = vcmp.eq.s32.totalorder %v215, 0
  %v218 = vxor.u32 %v212, 2147483648
  %v219 = vsel %vm217, %v211, %v218
  %vm220 = vcmp.eq.s32.totalorder %v215, 2
  %v221 = vxor.u32 %v211, 2147483648
  %v222 = vsel %vm220, %v221, %v212
  %v223 = vsel %vm216, %v219, %v222
  %v224 = vsel %vm213, nan, %v223
  %v225 = vmul.f32 %v11, 0.70710677
  %v226 = vmul.f32 %v12, 0.70710677
  %v227 = verf.f32.pop %v225
  %v228 = verf.f32.pop %v226
  %v229 = vmul.f32 %v227, 0.5
  %v230 = vmul.f32 %v228, 0.5
  %v231 = vadd.f32 %v229, 0.5
  %v232 = vadd.f32 %v230, 0.5
  %v233 = vmul.f32 %v11, %v231
  %v234 = vmul.f32 %v12, %v232
  %v235 = vsel %vm15, %v120, %v233
  %v236 = vsel %vm16, %v224, %v234
  %237 = vst [vmem:[%s2] sm:$0xff] %v235
  %238 = vst [vmem:[%s2 + $0x8] sm:$0xff] %v236
  // Predicated region
  $region10: #{_singelu.1} parent=0 // pred_check
    _
  $region11: #{_singelu.1} parent=0 // pred_check_branch
    %240 = sbr.rel (0) target = $region13
  $region12: #{_singelu.1} parent=0 // pred_region
    _
  $region13: #{_singelu.1} parent=0 // pred_fallthru
    _
  // Predicated region
  $region14: #{_singelu.1} parent=0 // pred_check
    _
  $region15: #{_singelu.1} parent=0 // pred_check_branch
    %242 = sbr.rel (0) target = $region17
  $region16: #{_singelu.1} parent=0 // pred_region
    _
  $region17: #{_singelu.1} parent=0 // pred_fallthru
    _

</llo_original>
